<compile_context>
chip_gen: v7x
topology: tpu7x:2x2x1
jax: 0.10.0
libtpu: 0.0.40
codegen_flags: <defaults>
</compile_context>

<pallas_src>
import functools

import jax
import jax.numpy as jnp
import numpy as np
from jax.experimental import pallas as pl
from jax.experimental.pallas import tpu as pltpu


# ----------------------------------------------------------------------------
# Generation-aware VMEM budget.
# ----------------------------------------------------------------------------
@functools.lru_cache(maxsize=None)
def _vmem_limit_bytes():
    cap = None
    try:
        info = pltpu.get_tpu_info()
        cap = getattr(info, "vmem_capacity_bytes", None)
    except Exception:
        cap = None
    if not cap:
        return 48 * 1024 * 1024  # conservative: fits v7x's 64 MiB physical VMEM
    # ~48 MiB on v7x (64 MiB physical), ~96 MiB on v5e/v6e (128 MiB physical).
    return int(min(cap * 3 // 4, 96 * 1024 * 1024))


def _round_up(x, m):
    return ((x + m - 1) // m) * m


def _tile_for(dim, candidates=(512, 256, 128)):
    """Pick a tile for `dim`.  Returns (tile, padded_dim)."""
    for c in candidates:
        if dim % c == 0:
            return c, dim
    if dim <= candidates[-1]:
        return dim, dim               # small dim: single full-extent block
    padded = _round_up(dim, candidates[-1])
    return candidates[-1], padded     # large, non-divisible: pad to tile grid


def _pick_div(dim, candidates):
    """Largest candidate dividing dim, else the full dim."""
    for c in candidates:
        if dim % c == 0:
            return c
    return dim


# ----------------------------------------------------------------------------
# Tiled linear kernels: y = x @ W^T [+ b]; W passed pre-transposed as (K, N).
# bf16 MXU operands, f32 accumulator scratch, reduction axis last.
# ----------------------------------------------------------------------------
def _matmul_kernel(x_ref, w_ref, o_ref, acc_ref):
    @pl.when(pl.program_id(2) == 0)
    def _init():
        acc_ref[...] = jnp.zeros_like(acc_ref)

    acc_ref[...] += jnp.dot(
        x_ref[...].astype(jnp.bfloat16),
        w_ref[...].astype(jnp.bfloat16),
        preferred_element_type=jnp.float32,
    )

    @pl.when(pl.program_id(2) == pl.num_programs(2) - 1)
    def _store():
        o_ref[...] = acc_ref[...].astype(o_ref.dtype)


def _matmul_bias_kernel(x_ref, w_ref, b_ref, o_ref, acc_ref):
    @pl.when(pl.program_id(2) == 0)
    def _init():
        acc_ref[...] = jnp.zeros_like(acc_ref)

    acc_ref[...] += jnp.dot(
        x_ref[...].astype(jnp.bfloat16),
        w_ref[...].astype(jnp.bfloat16),
        preferred_element_type=jnp.float32,
    )

    @pl.when(pl.program_id(2) == pl.num_programs(2) - 1)
    def _store():
        o_ref[...] = (acc_ref[...] + b_ref[...].astype(jnp.float32)).astype(
            o_ref.dtype
        )


def linear(x2d, w_t, bias=None, out_dtype=None):
    """x2d: (M, K); w_t: (K, N) pre-transposed from torch (N, K) layout."""
    M, K = x2d.shape
    Kw, N = w_t.shape
    assert K == Kw
    out_dtype = out_dtype or x2d.dtype

    tm, Mp = _tile_for(M, (512, 256, 128))
    tk, Kp = _tile_for(K, (1024, 512, 256, 128))
    tn, Np = _tile_for(N, (512, 256, 128))

    if Mp != M or Kp != K:
        x2d = jnp.pad(x2d, ((0, Mp - M), (0, Kp - K)))
    if Kp != K or Np != N:
        w_t = jnp.pad(w_t, ((0, Kp - K), (0, Np - N)))

    grid = (Mp // tm, Np // tn, Kp // tk)
    compiler_params = pltpu.CompilerParams(
        dimension_semantics=("parallel", "parallel", "arbitrary"),
        vmem_limit_bytes=_vmem_limit_bytes(),
    )
    scratch = [pltpu.VMEM((tm, tn), jnp.float32)]

    if bias is None:
        out = pl.pallas_call(
            _matmul_kernel,
            out_shape=jax.ShapeDtypeStruct((Mp, Np), out_dtype),
            grid=grid,
            in_specs=[
                pl.BlockSpec((tm, tk), lambda i, j, k: (i, k)),
                pl.BlockSpec((tk, tn), lambda i, j, k: (k, j)),
            ],
            out_specs=pl.BlockSpec((tm, tn), lambda i, j, k: (i, j)),
            scratch_shapes=scratch,
            compiler_params=compiler_params,
        )(x2d, w_t)
    else:
        b2d = bias.reshape(1, N).astype(jnp.float32)
        if Np != N:
            b2d = jnp.pad(b2d, ((0, 0), (0, Np - N)))
        out = pl.pallas_call(
            _matmul_bias_kernel,
            out_shape=jax.ShapeDtypeStruct((Mp, Np), out_dtype),
            grid=grid,
            in_specs=[
                pl.BlockSpec((tm, tk), lambda i, j, k: (i, k)),
                pl.BlockSpec((tk, tn), lambda i, j, k: (k, j)),
                pl.BlockSpec((1, tn), lambda i, j, k: (0, j)),
            ],
            out_specs=pl.BlockSpec((tm, tn), lambda i, j, k: (i, j)),
            scratch_shapes=scratch,
            compiler_params=compiler_params,
        )(x2d, w_t, b2d)

    if Mp != M or Np != N:
        out = out[:M, :N]
    return out


# ----------------------------------------------------------------------------
# Flash-style attention core.
#   q/k/v are head-major bf16: (B, H, T, s).  Grid = (B, TQ//tq, TK//tkv);
#   the kv axis is the trailing "arbitrary" axis with an online softmax kept
#   in f32 VMEM scratch.  Scores / PV are one batched matmul over all heads.
#   Output (B, TQ, E) is written once per (b, q-tile) as a lane-dense store.
# ----------------------------------------------------------------------------
def _flash_attn_kernel(q_ref, k_ref, v_ref, o_ref, m_sc, l_sc, acc_sc):
    # q_ref: (H, tq, s) bf16, k_ref/v_ref: (H, tkv, s) bf16, o_ref: (tq, E)
    j = pl.program_id(2)

    @pl.when(j == 0)
    def _init():
        m_sc[...] = jnp.full(m_sc.shape, -jnp.inf, m_sc.dtype)
        l_sc[...] = jnp.zeros(l_sc.shape, l_sc.dtype)
        acc_sc[...] = jnp.zeros(acc_sc.shape, acc_sc.dtype)

    q = q_ref[...]  # bf16, scale already folded into the query weights
    k = k_ref[...]
    v = v_ref[...]

    # All heads in one batched MXU pass: (H, tq, s) x (H, tkv, s) -> (H, tq, tkv)
    scores = jnp.einsum(
        "hqd,hkd->hqk", q, k, preferred_element_type=jnp.float32
    )

    m_prev = m_sc[...]
    m_new = jnp.maximum(m_prev, scores.max(axis=-1, keepdims=True))
    alpha = jnp.exp(m_prev - m_new)          # f32 elementwise (v5e-safe)
    p = jnp.exp(scores - m_new)              # f32
    l_sc[...] = alpha * l_sc[...] + p.sum(axis=-1, keepdims=True)
    pv = jnp.einsum(
        "hqk,hkd->hqd", p.astype(v.dtype), v, preferred_element_type=jnp.float32
    )
    acc_sc[...] = alpha * acc_sc[...] + pv
    m_sc[...] = m_new

    @pl.when(j == pl.num_programs(2) - 1)
    def _finish():
        inv_l = pl.reciprocal(l_sc[...], approx=True)   # EUP slot (~free)
        out = acc_sc[...] * inv_l                        # (H, tq, s) f32
        heads = out.shape[0]
        # Single lane-dense (tq, E) store; head columns concatenated in-kernel.
        merged = jnp.concatenate([out[h] for h in range(heads)], axis=-1)
        o_ref[...] = merged.astype(o_ref.dtype)


def attention_core(q_hm, k_hm, v_hm, out_dtype=jnp.bfloat16):
    B, H, TQ, S = q_hm.shape
    TK = k_hm.shape[2]
    E = H * S

    # TODO(synk): for TQ/TK not divisible by the tile candidates at large
    # sizes, add padding + kv masking; small/odd sizes fall back to full dim.
    tq = _pick_div(TQ, (256, 128))
    tkv = _pick_div(TK, (512, 256, 128))

    return pl.pallas_call(
        _flash_attn_kernel,
        out_shape=jax.ShapeDtypeStruct((B, TQ, E), out_dtype),
        grid=(B, TQ // tq, TK // tkv),
        in_specs=[
            pl.BlockSpec((None, H, tq, S), lambda b, i, j: (b, 0, i, 0)),
            pl.BlockSpec((None, H, tkv, S), lambda b, i, j: (b, 0, j, 0)),
            pl.BlockSpec((None, H, tkv, S), lambda b, i, j: (b, 0, j, 0)),
        ],
        out_specs=pl.BlockSpec((None, tq, E), lambda b, i, j: (b, i, 0)),
        scratch_shapes=[
            pltpu.VMEM((H, tq, 1), jnp.float32),   # running max
            pltpu.VMEM((H, tq, 1), jnp.float32),   # running denominator
            pltpu.VMEM((H, tq, S), jnp.float32),   # output accumulator
        ],
        compiler_params=pltpu.CompilerParams(
            dimension_semantics=("parallel", "parallel", "arbitrary"),
            vmem_limit_bytes=_vmem_limit_bytes(),
        ),
    )(q_hm, k_hm, v_hm)


# ----------------------------------------------------------------------------
# Parameters and full module forward.
# ----------------------------------------------------------------------------
def init_params(key, emb):
    """Deterministic init; torch nn.Linear layout: weight is (out, in)."""
    k1, k2, k3, k4, k5 = jax.random.split(key, 5)
    bound = 1.0 / np.sqrt(emb)
    u = lambda k, shp: jax.random.uniform(k, shp, jnp.float32, -bound, bound)
    return {
        "wk": u(k1, (emb, emb)),
        "wq": u(k2, (emb, emb)),
        "wv": u(k3, (emb, emb)),
        "wu": u(k4, (emb, emb)),
        "bu": u(k5, (emb,)),
    }


def prepare_params(params, heads):
    """Pre-transpose weights once, fold the 1/sqrt(s) softmax scale into the
    query weights, build a fused QKV weight, and cast weights to bf16."""
    emb = params["wq"].shape[0]
    s = emb // heads
    scale = 1.0 / (s ** 0.5)          # == (s**-0.25 applied to both q and k)
    wq_t = params["wq"].T * scale
    wk_t = params["wk"].T
    wv_t = params["wv"].T
    cast = lambda w: w.astype(jnp.bfloat16)
    return {
        "wq_t": cast(wq_t),
        "wk_t": cast(wk_t),
        "wv_t": cast(wv_t),
        "wqkv_t": cast(jnp.concatenate([wq_t, wk_t, wv_t], axis=1)),
        "wu_t": cast(params["wu"].T),
        "bu": params["bu"].astype(jnp.float32),
    }


def attention_forward(prepared, queries, keys, values, heads,
                      self_attention=None):
    # TODO(synk): mask=True (causal mask_) and kqnorm=True (per-head LayerNorm)
    # paths are not implemented; this reproduces the default configuration.
    b, tk_len, e = keys.shape
    assert values.shape == keys.shape
    assert queries.shape[0] == b and queries.shape[2] == e
    tq_len = queries.shape[1]
    h = heads
    assert e % h == 0
    s = e // h

    if self_attention is None:
        # Perf-only fast path; equal-but-distinct arrays take the 3-matmul path.
        self_attention = queries is keys and keys is values

    if self_attention:
        # Fused QKV projection: read x from HBM once, one (E, 3E) matmul.
        qkv = linear(queries.reshape(b * tq_len, e), prepared["wqkv_t"],
                     out_dtype=jnp.bfloat16)                       # (b*t, 3e)
        qkv = qkv.reshape(b, tq_len, 3, h, s).transpose(2, 0, 3, 1, 4)
        q_hm, k_hm, v_hm = qkv[0], qkv[1], qkv[2]                  # (b, h, t, s)
    else:
        def proj(x, t, w_t):
            y = linear(x.reshape(b * t, e), w_t, out_dtype=jnp.bfloat16)
            return y.reshape(b, t, h, s).transpose(0, 2, 1, 3)     # (b, h, t, s)
        q_hm = proj(queries, tq_len, prepared["wq_t"])
        k_hm = proj(keys, tk_len, prepared["wk_t"])
        v_hm = proj(values, tk_len, prepared["wv_t"])

    # Flash attention over all heads; output already in (b, tq, E) layout.
    out = attention_core(q_hm, k_hm, v_hm, out_dtype=jnp.bfloat16)

    out = linear(out.reshape(b * tq_len, e), prepared["wu_t"],
                 bias=prepared["bu"], out_dtype=queries.dtype)
    return out.reshape(b, tq_len, e)


def attention_reference(params, queries, keys, values, heads):
    """Pure-JAX f32 reference mirroring the PyTorch code."""
    b, tk, e = keys.shape
    tq = queries.shape[1]
    h = heads
    s = e // h
    k = keys @ params["wk"].T
    q = queries @ params["wq"].T
    v = values @ params["wv"].T
    q = q.reshape(b, tq, h, s).transpose(0, 2, 1, 3).reshape(b * h, tq, s)
    k = k.reshape(b, tk, h, s).transpose(0, 2, 1, 3).reshape(b * h, tk, s)
    v = v.reshape(b, tk, h, s).transpose(0, 2, 1, 3).reshape(b * h, tk, s)
    q = q / s ** 0.25
    k = k / s ** 0.25
    dot = jnp.einsum("bqs,bks->bqk", q, k)
    dot = jax.nn.softmax(dot, axis=2)
    out = jnp.einsum("bqk,bks->bqs", dot, v)
    out = out.reshape(b, h, tq, s).transpose(0, 2, 1, 3).reshape(b, tq, h * s)
    return out @ params["wu"].T + params["bu"]


if __name__ == "__main__":
    B, TQ, TK, EMB, HEADS = 2, 8, 8, 32, 8

    key = jax.random.PRNGKey(0)
    kq, kk, kv, kp = jax.random.split(key, 4)
    queries = jax.random.normal(kq, (B, TQ, EMB), jnp.float32)
    keys = jax.random.normal(kk, (B, TK, EMB), jnp.float32)
    values = jax.random.normal(kv, (B, TK, EMB), jnp.float32)
    params = init_params(kp, EMB)
    prepared = prepare_params(params, HEADS)

    # Cross-attention path (distinct q/k/v inputs).
    out = attention_forward(prepared, queries, keys, values, HEADS)
    out = jax.block_until_ready(out)
    ref = attention_reference(params, queries, keys, values, HEADS)
    assert out.shape == (B, TQ, EMB), out.shape
    # Tolerance accounts for bf16 MXU operands / bf16 intermediates.
    np.testing.assert_allclose(np.asarray(out), np.asarray(ref),
                               rtol=5e-2, atol=5e-2)

    # Self-attention path (fused QKV projection).
    out_sa = attention_forward(prepared, queries, queries, queries, HEADS)
    out_sa = jax.block_until_ready(out_sa)
    ref_sa = attention_reference(params, queries, queries, queries, HEADS)
    np.testing.assert_allclose(np.asarray(out_sa), np.asarray(ref_sa),
                               rtol=5e-2, atol=5e-2)

    print("KERNEL_OK")
</pallas_src>

<mosaic_0001>
module attributes {stable_mosaic.version = 11 : i64} {
  func.func @_matmul_kernel(%arg0: i32, %arg1: i32, %arg2: i32, %arg3: memref<16x32xf32, #tpu.memory_space<vmem>>, %arg4: memref<32x32xbf16, #tpu.memory_space<vmem>>, %arg5: memref<16x32xbf16, #tpu.memory_space<vmem>>, %arg6: memref<16x32xf32, #tpu.memory_space<vmem>>) attributes {dimension_semantics = [#tpu.dimension_semantics<parallel>, #tpu.dimension_semantics<parallel>, #tpu.dimension_semantics<arbitrary>], iteration_bounds = array<i64: 1, 1, 1>, scalar_prefetch = 0 : i64, scratch_operands = 1 : i64, tpu.core_type = #tpu.core_type<tc>, window_params = [{transform_indices = @transform_0, window_bounds = array<i64: 16, 32>}, {transform_indices = @transform_1, window_bounds = array<i64: 32, 32>}, {transform_indices = @transform_2, window_bounds = array<i64: 16, 32>}]} {
    %c0_i32 = arith.constant 0 : i32
    %0 = arith.cmpi eq, %arg2, %c0_i32 : i32
    %1 = arith.extui %0 : i1 to i32
    %c0_i32_0 = arith.constant 0 : i32
    %2 = arith.cmpi ne, %1, %c0_i32_0 : i32
    scf.if %2 {
      %cst_10 = arith.constant 0.000000e+00 : f32
      %13 = vector.broadcast %cst_10 : f32 to vector<16x32xf32>
      %c0_11 = arith.constant 0 : index
      %c0_12 = arith.constant 0 : index
      %14 = vector.load %arg6[%c0_11, %c0_12] : memref<16x32xf32, #tpu.memory_space<vmem>>, vector<16x32xf32>
      tpu.vector_store %arg6[%c0_11, %c0_12], %13 {strides = array<i32>} : memref<16x32xf32, #tpu.memory_space<vmem>>, vector<16x32xf32>,
    } else {
    }
    %c0 = arith.constant 0 : index
    %c0_1 = arith.constant 0 : index
    %3 = vector.load %arg6[%c0, %c0_1] : memref<16x32xf32, #tpu.memory_space<vmem>>, vector<16x32xf32>
    %c0_2 = arith.constant 0 : index
    %c0_3 = arith.constant 0 : index
    %4 = vector.load %arg3[%c0_2, %c0_3] : memref<16x32xf32, #tpu.memory_space<vmem>>, vector<16x32xf32>
    %5 = arith.truncf %4 : vector<16x32xf32> to vector<16x32xbf16>
    %c0_4 = arith.constant 0 : index
    %c0_5 = arith.constant 0 : index
    %6 = vector.load %arg4[%c0_4, %c0_5] : memref<32x32xbf16, #tpu.memory_space<vmem>>, vector<32x32xbf16>
    %cst = arith.constant dense<0.000000e+00> : vector<16x32xf32>
    %7 = tpu.matmul %5, %6, %cst {dimension_numbers = #tpu.dot_dimension_numbers<[1], [0], [0], [1], [0, 0, 1, 1], [], []>} : vector<16x32xbf16>, vector<32x32xbf16>, vector<16x32xf32> -> vector<16x32xf32>
    %8 = arith.addf %3, %7 : vector<16x32xf32>
    %c0_6 = arith.constant 0 : index
    %c0_7 = arith.constant 0 : index
    %9 = vector.load %arg6[%c0_6, %c0_7] : memref<16x32xf32, #tpu.memory_space<vmem>>, vector<16x32xf32>
    tpu.vector_store %arg6[%c0_6, %c0_7], %8 {strides = array<i32>} : memref<16x32xf32, #tpu.memory_space<vmem>>, vector<16x32xf32>,
    %c0_i32_8 = arith.constant 0 : i32
    %10 = arith.cmpi eq, %arg2, %c0_i32_8 : i32
    %11 = arith.extui %10 : i1 to i32
    %c0_i32_9 = arith.constant 0 : i32
    %12 = arith.cmpi ne, %11, %c0_i32_9 : i32
    scf.if %12 {
      %c0_10 = arith.constant 0 : index
      %c0_11 = arith.constant 0 : index
      %13 = vector.load %arg6[%c0_10, %c0_11] : memref<16x32xf32, #tpu.memory_space<vmem>>, vector<16x32xf32>
      %14 = arith.truncf %13 : vector<16x32xf32> to vector<16x32xbf16>
      %c0_12 = arith.constant 0 : index
      %c0_13 = arith.constant 0 : index
      %15 = vector.load %arg5[%c0_12, %c0_13] : memref<16x32xbf16, #tpu.memory_space<vmem>>, vector<16x32xbf16>
      tpu.vector_store %arg5[%c0_12, %c0_13], %14 {strides = array<i32>} : memref<16x32xbf16, #tpu.memory_space<vmem>>, vector<16x32xbf16>,
    } else {
    }
    return
  }
  func.func @transform_0(%arg0: i32, %arg1: i32, %arg2: i32) -> (i32, i32) {
    %c0_i32 = arith.constant 0 : i32
    return %arg0, %arg2 : i32, i32
  }
  func.func @transform_1(%arg0: i32, %arg1: i32, %arg2: i32) -> (i32, i32) {
    %c0_i32 = arith.constant 0 : i32
    return %arg2, %arg1 : i32, i32
  }
  func.func @transform_2(%arg0: i32, %arg1: i32, %arg2: i32) -> (i32, i32) {
    %c0_i32 = arith.constant 0 : i32
    return %arg0, %arg1 : i32, i32
  }
}

</mosaic_0001>

<llo_original>
// kernel: tpu_custom_call.1
$region0: #{tpu_custom_call.1}
  #allocation0 [shape = 'u32[]', space=smem, size = 0x4, offset = 0x4, fixed_abs, tag = 'smem constant byte address 0x4 - core index']
  #allocation1 [shape = 'u32[144,128]{1,0:T(1,128)}', space=vmem, size = 0x12000, scoped, tag = 'internal scratch']
  #allocation2 [shape = 'f32[16,32]{1,0:T(8,128)}', space=vmem, size = 0x2000, scoped, tag = 'scratch operand']
  %s0 = inlined_call_operand.hbm [shape: f32[16,32], index: 0, kind: input, shape index: {}]
  %s1 = inlined_call_operand.hbm [shape: bf16[32,32], index: 1, kind: input, shape index: {}]
  %s2 = inlined_call_operand.hbm [shape: bf16[16,32], index: 2, kind: output, shape index: {}]
  %s3 = sld [smem:[#allocation0]]
  $region34: #{tpu_custom_call.1} parent=0
    _
  %s5 = ssub.s32 1, %s3
  %s6 = scalar_select 0, %s5, %s3
  $region1: #{tpu_custom_call.1} parent=0
    #allocation3 [shape = 'u8[8192]{0}', space=vmem, size = 0x2000, scoped, tag = 'input window, operand 0, single buffered']
    #allocation4 [shape = 's32[1]{0}', space=sflag, size = 0x4, scoped, tag = 'scoped memory for tpu_custom_call.1']
    #allocation5 [shape = 's32[1]{0}', space=sflag, size = 0x4, scoped, tag = 'scoped memory for tpu_custom_call.1']
    #allocation6 [shape = 'u8[8192]{0}', space=vmem, size = 0x2000, scoped, tag = 'input window, operand 1, single buffered']
    #allocation7 [shape = 's32[1]{0}', space=sflag, size = 0x4, scoped, tag = 'scoped memory for tpu_custom_call.1']
    #allocation8 [shape = 'u8[4096]{0}', space=vmem, size = 0x1000, scoped, tag = 'output window, operand 0, single buffered']
    %7 = vsyncpa [#allocation4], 0
    %8 = vsyncpa [#allocation7], 0
    %9 = vsyncpa [#allocation5], 0
    // Predicated region
    $region2: #{tpu_custom_call.1} parent=1 // pred_check
      _
    $region3: #{tpu_custom_call.1} parent=1 // pred_check_branch
      %11 = sbr.rel (0) target = $region5
    $region4: #{tpu_custom_call.1} parent=1 // pred_region
      %s13 = ssub.s32 256, 256
      %14 = vsyncadd [#allocation4], %s13
      %s15 = sshll.u32 [#allocation3], 4
      %s16 = int_to_ptr.vmem [resolvable:$true] %s15
      %21 = dma.hbm_to_vmem [thread:$0]  %s0, 256, %s16, [#allocation4], 128, 128, 8
    $region5: #{tpu_custom_call.1} parent=1 // pred_fallthru
      _
    // Predicated region
    $region6: #{tpu_custom_call.1} parent=1 // pred_check
      _
    $region7: #{tpu_custom_call.1} parent=1 // pred_check_branch
      %23 = sbr.rel (0) target = $region9
    $region8: #{tpu_custom_call.1} parent=1 // pred_region
      %s25 = ssub.s32 256, 256
      %26 = vsyncadd [#allocation7], %s25
      %s27 = sshll.u32 [#allocation6], 4
      %s28 = int_to_ptr.vmem [resolvable:$true] %s27
      %33 = dma.hbm_to_vmem [thread:$0]  %s1, 256, %s28, [#allocation7], 64, 64, 4
    $region9: #{tpu_custom_call.1} parent=1 // pred_fallthru
      _
    // Predicated region
    $region10: #{tpu_custom_call.1} parent=1 // pred_check
      _
    $region11: #{tpu_custom_call.1} parent=1 // pred_check_branch
      %35 = sbr.rel (0) target = $region13
    $region12: #{tpu_custom_call.1} parent=1 // pred_region
      %36 = dma.done [#allocation4], 256
    $region13: #{tpu_custom_call.1} parent=1 // pred_fallthru
      _
    // Predicated region
    $region14: #{tpu_custom_call.1} parent=1 // pred_check
      _
    $region15: #{tpu_custom_call.1} parent=1 // pred_check_branch
      %38 = sbr.rel (0) target = $region17
    $region16: #{tpu_custom_call.1} parent=1 // pred_region
      %39 = dma.done [#allocation7], 256
    $region17: #{tpu_custom_call.1} parent=1 // pred_fallthru
      _
    %p41 = scmp.eq.s32.totalorder 0, 0
    // Predicated region
    $region18: #{tpu_custom_call.1} parent=1 // pred_check
      %p42 = pneg %p41
    $region19: #{tpu_custom_call.1} parent=1 // pred_check_branch
      %44 = sbr.rel (%p42) target = $region21
    $region20: #{tpu_custom_call.1} parent=1 // pred_region
      %vm45 = vcmask 261120
      %46 = vst.msk [vmem:[#allocation2] sm:$0xff] %vm45, 0.0
      %47 = vst.msk [vmem:[#allocation2 + $0x8] sm:$0xff] %vm45, 0.0
    $region21: #{tpu_custom_call.1} parent=1 // pred_fallthru
      _
    %v48 = vld [vmem:[#allocation2] sm:$0xff]
    %v49 = vld [vmem:[#allocation2 + $0x8] sm:$0xff]
    %v50 = vld [vmem:[#allocation3] sm:$0xff]
    %v51 = vld [vmem:[#allocation3 + $0x8] sm:$0xff]
    %v52 = vpack.c.bf16 %v51, %v50
    %v53 = vld [vmem:[#allocation6] sm:$0xf]
    %v54 = vld [vmem:[#allocation6 + $0x4] sm:$0xf]
    %v55 = vld [vmem:[#allocation6 + $0x8] sm:$0xf]
    %v56 = vld [vmem:[#allocation6 + $0xc] sm:$0xf]
    %v61 = vunpack.c.l.b16 %v53
    %v62 = vunpack.c.l.b16 %v54
    %v63 = vunpack.c.l.b16 %v55
    %v64 = vunpack.c.l.b16 %v56
    %v65 = vpack.c.b16 %v62, %v61
    %v66 = vpack.c.b16 %v64, %v63
    %vm69 = vcmask 261120
    %v71 = vsel %vm69, %v52, 0
    %73 = vmatprep.subr.bf16.mxu0 0
    %74 = vmatpush1.bf16.msra.mxu0 %v65
    %75 = vmatprep.subr.bf16.mxu0 0
    %76 = vmatpush1.bf16.msra.mxu0 %v66
    %77 = vmatprep.subr.bf16.mxu0 0
    %78 = vmatpush1.bf16.msra.mxu0 0
    %79 = vmatprep.subr.bf16.mxu0 0
    %80 = vmatpush1.bf16.msra.mxu0 0
    %81 = vmatprep.subr.bf16.mxu0 0
    %82 = vmatpush1.bf16.msra.mxu0 0
    %83 = vmatprep.subr.bf16.mxu0 0
    %84 = vmatpush1.bf16.msra.mxu0 0
    %85 = vmatprep.subr.bf16.mxu0 0
    %86 = vmatpush1.bf16.msra.mxu0 0
    %87 = vmatprep.subr.bf16.mxu0 0
    %88 = vmatpush1.bf16.msra.mxu0 0
    %89 = vmatprep.subr.bf16.mxu0 0
    %90 = vmatpush1.bf16.msra.mxu0 0
    %91 = vmatprep.subr.bf16.mxu0 0
    %92 = vmatpush1.bf16.msra.mxu0 0
    %93 = vmatprep.subr.bf16.mxu0 0
    %94 = vmatpush1.bf16.msra.mxu0 0
    %95 = vmatprep.subr.bf16.mxu0 0
    %96 = vmatpush1.bf16.msra.mxu0 0
    %97 = vmatprep.subr.bf16.mxu0 0
    %98 = vmatpush1.bf16.msra.mxu0 0
    %99 = vmatprep.subr.bf16.mxu0 0
    %100 = vmatpush1.bf16.msra.mxu0 0
    %101 = vmatprep.subr.bf16.mxu0 0
    %102 = vmatpush1.bf16.msra.mxu0 0
    %103 = vmatprep.subr.bf16.mxu0 0
    %104 = vmatpush1.bf16.msra.mxu0 0
    %105 = vmatprep.mubr.bf16.mxu0 0
    %106 = vmatmul.mubr.bf16.gmra.mrb[0].mxu0 %v71
    %v107 = vpop.f32.mrb[0].mxu0
    %v108 = vadd.f32 0.0, %v107
    %v109 = vpop.f32.mrb[0].mxu0
    %v110 = vpop.f32.mrb[0].mxu0
    %v111 = vadd.f32 0.0, %v110
    %v112 = vpop.f32.mrb[0].mxu0
    %113 = vdwg.mxu0
    %v114 = vadd.f32 %v48, %v108
    %v115 = vadd.f32 %v49, %v111
    %116 = vst.msk [vmem:[#allocation2] sm:$0xff] %vm69, %v114
    %117 = vst.msk [vmem:[#allocation2 + $0x8] sm:$0xff] %vm69, %v115
    // Predicated region
    $region22: #{tpu_custom_call.1} parent=1 // pred_check
      %p118 = pneg %p41
    $region23: #{tpu_custom_call.1} parent=1 // pred_check_branch
      %120 = sbr.rel (%p118) target = $region25
    $region24: #{tpu_custom_call.1} parent=1 // pred_region
      %v121 = vld [vmem:[#allocation2] sm:$0xff]
      %v122 = vld [vmem:[#allocation2 + $0x8] sm:$0xff]
      %v123 = vpack.c.bf16 %v122, %v121
      %v125 = vunpack.c.l.b16 %v123
      %v126 = vunpack.c.h.b16 %v123
      %v127 = vpack.c.b16 %v125, %v125
      %v128 = vpack.c.b16 %v126, %v126
      %vm131 = vcmask 257024
      %132 = vst.msk [vmem:[#allocation8] sm:$0xf] %vm131, %v127
      %133 = vst.msk [vmem:[#allocation8 + $0x4] sm:$0xf] %vm131, %v128
    $region25: #{tpu_custom_call.1} parent=1 // pred_fallthru
      _
    // Predicated region
    $region26: #{tpu_custom_call.1} parent=1 // pred_check
      _
    $region27: #{tpu_custom_call.1} parent=1 // pred_check_branch
      %135 = sbr.rel (0) target = $region29
    $region28: #{tpu_custom_call.1} parent=1 // pred_region
      %s137 = ssub.s32 128, 128
      %138 = vsyncadd [#allocation5], %s137
      %s139 = sshll.u32 [#allocation8], 4
      %s140 = int_to_ptr.vmem [resolvable:$true] %s139
      %145 = dma.vmem_to_hbm [thread:$0]  %s140, 128, %s2, [#allocation5], 64, 64, 4
    $region29: #{tpu_custom_call.1} parent=1 // pred_fallthru
      _
    // Predicated region
    $region30: #{tpu_custom_call.1} parent=1 // pred_check
      _
    $region31: #{tpu_custom_call.1} parent=1 // pred_check_branch
      %147 = sbr.rel (0) target = $region33
    $region32: #{tpu_custom_call.1} parent=1 // pred_region
      %148 = dma.done [#allocation5], 128
    $region33: #{tpu_custom_call.1} parent=1 // pred_fallthru
      _
    %149 = vsyncpa [#allocation4], 1
    %150 = vsyncpa [#allocation7], 1
    %151 = vsyncpa [#allocation5], 1

</llo_original>
